<compile_context>
chip_gen: v7x
topology: tpu7x:2x2x1
jax: 0.10.0
libtpu: 0.0.40
codegen_flags: <defaults>
</compile_context>

<pallas_src>
import functools

import jax
import jax.numpy as jnp
from jax.experimental import pallas as pl
from jax.experimental.pallas import tpu as pltpu

LANES = 1024          # lane-dense slab width (multiple of 128)
MAX_BLOCK_ROWS = 512  # 512 x 1024 x 4B = 2 MiB per f32 buffer


def _hash_u32(x, key):
    """lowbias32-style avalanche hash.  x: uint32 array, key: uint32 scalar."""
    x = x * jnp.uint32(0x9E3779B1) + key
    x = (x ^ (x >> 16)) * jnp.uint32(0x7FEB352D)
    x = (x ^ (x >> 15)) * jnp.uint32(0x846CA68B)
    return x ^ (x >> 16)


def _gaussian_noise_kernel(seed_ref, x_ref, o_ref, *, mean, std):
    rows, cols = x_ref.shape          # static block shape
    half = cols // 2                  # Box-Muller: 2 normals per uniform pair

    # Global pair counter for this block -> independent streams per element
    # regardless of grid sharding / core assignment.
    r_idx = jax.lax.broadcasted_iota(jnp.int32, (rows, half), 0)
    c_idx = jax.lax.broadcasted_iota(jnp.int32, (rows, half), 1)
    base = pl.program_id(0) * (rows * half)
    pair_idx = (base + r_idx * half + c_idx).astype(jnp.uint32)

    seed = seed_ref[0].astype(jnp.uint32)
    key1 = seed * jnp.uint32(0x85EBCA77) + jnp.uint32(0xC2B2AE3D)
    key2 = seed * jnp.uint32(0x27D4EB2F) + jnp.uint32(0x165667B1)

    inv24 = jnp.float32(1.0 / (1 << 24))
    # >>8 keeps 24 bits -> exact int32 -> f32 convert (sitofp path).
    b1 = (_hash_u32(pair_idx, key1) >> 8).astype(jnp.int32).astype(jnp.float32)
    b2 = (_hash_u32(pair_idx, key2) >> 8).astype(jnp.int32).astype(jnp.float32)
    u1 = b1 * inv24 + jnp.float32(0.5 / (1 << 24))   # (0, 1): safe for log
    u2 = b2 * inv24                                   # [0, 1)

    # Box-Muller; fold std into the radius so each half needs one mul + add.
    r = jnp.sqrt(jnp.float32(-2.0) * jnp.log(u1)) * jnp.float32(std)
    theta = jnp.float32(2.0 * jnp.pi) * u2
    mean_f = jnp.float32(mean)

    # Two disjoint, 128-aligned 512-lane stores (unmasked vst), no concat.
    o_ref[:, :half] = (x_ref[:, :half].astype(jnp.float32)
                       + r * jnp.cos(theta) + mean_f).astype(o_ref.dtype)
    o_ref[:, half:] = (x_ref[:, half:].astype(jnp.float32)
                       + r * jnp.sin(theta) + mean_f).astype(o_ref.dtype)


def gaussian_noise(x, *, seed=0, mean=0.0, std=1.0):
    """y = x + N(mean, std**2) noise of x.shape (matches the torch module)."""
    orig_shape = x.shape
    dtype = x.dtype
    n = x.size

    # Lane-dense slab: flatten to (rows, LANES); pad only when size is not a
    # multiple of LANES (zero-copy reshape in the aligned case).
    n_padded = pl.cdiv(n, LANES) * LANES
    flat = x.reshape(-1)
    if n_padded != n:
        # TODO(synk): handle the tail with a masked final block instead of a
        # pad pass; negligible for LANES-aligned sizes.
        flat = jnp.pad(flat, (0, n_padded - n))
    xs = flat.reshape(-1, LANES)
    rows = xs.shape[0]

    block_rows = min(MAX_BLOCK_ROWS, rows)   # full-dim block for small inputs
    grid = pl.cdiv(rows, block_rows)

    seed_arr = jnp.array([seed], dtype=jnp.int32)
    kernel = functools.partial(_gaussian_noise_kernel,
                               mean=float(mean), std=float(std))

    out = pl.pallas_call(
        kernel,
        out_shape=jax.ShapeDtypeStruct((rows, LANES), dtype),
        grid_spec=pltpu.PrefetchScalarGridSpec(
            num_scalar_prefetch=1,                     # seed lives in SMEM
            grid=(grid,),
            in_specs=[pl.BlockSpec((block_rows, LANES), lambda i, seed: (i, 0))],
            out_specs=pl.BlockSpec((block_rows, LANES), lambda i, seed: (i, 0)),
        ),
        compiler_params=pltpu.CompilerParams(
            dimension_semantics=("parallel",),         # shard across TCs on v7x
            vmem_limit_bytes=64 * 1024 * 1024,
        ),
    )(seed_arr, xs)

    return out.reshape(-1)[:n].reshape(orig_shape)


if __name__ == "__main__":
    key = jax.random.PRNGKey(0)
    x = jax.random.normal(key, (2, 4, 16, 16), dtype=jnp.float32)  # NCHW

    y = gaussian_noise(x, seed=1234, mean=0.0, std=1.0)
    y = jax.block_until_ready(y)

    assert y.shape == x.shape and y.dtype == x.dtype
    noise = y - x
    # statistical sanity: ~N(0, 1) over 2048 samples
    assert abs(float(jnp.mean(noise))) < 0.2
    assert 0.7 < float(jnp.std(noise)) < 1.3

    print("KERNEL_OK")
</pallas_src>

<mosaic_0001>
module attributes {stable_mosaic.version = 11 : i64} {
  func.func @_gaussian_noise_kernel(%arg0: i32, %arg1: memref<1xi32, #tpu.memory_space<smem>>, %arg2: memref<2x1024xf32, #tpu.memory_space<vmem>>, %arg3: memref<2x1024xf32, #tpu.memory_space<vmem>>) attributes {dimension_semantics = [#tpu.dimension_semantics<parallel>], iteration_bounds = array<i64: 1>, scalar_prefetch = 1 : i64, scratch_operands = 0 : i64, tpu.core_type = #tpu.core_type<tc>, window_params = [{transform_indices = @transform_0, window_bounds = array<i64: 2, 1024>}, {transform_indices = @transform_1, window_bounds = array<i64: 2, 1024>}]} {
    %0 = tpu.iota {dimensions = array<i32: 0>} : vector<2x512xi32>
    %1 = tpu.iota {dimensions = array<i32: 1>} : vector<2x512xi32>
    %c1024_i32 = arith.constant 1024 : i32
    %2 = arith.muli %arg0, %c1024_i32 : i32
    %c512_i32 = arith.constant 512 : i32
    %3 = vector.broadcast %c512_i32 : i32 to vector<2x512xi32>
    %4 = arith.muli %0, %3 : vector<2x512xi32>
    %5 = vector.broadcast %2 : i32 to vector<2x512xi32>
    %6 = arith.addi %5, %4 : vector<2x512xi32>
    %7 = arith.addi %6, %1 : vector<2x512xi32>
    %c0 = arith.constant 0 : index
    %8 = memref.load %arg1[%c0] : memref<1xi32, #tpu.memory_space<smem>>
    %c-2048144777_i32 = arith.constant -2048144777 : i32
    %9 = arith.muli %8, %c-2048144777_i32 : i32
    %c-1028477379_i32 = arith.constant -1028477379 : i32
    %10 = arith.addi %9, %c-1028477379_i32 : i32
    %c668265263_i32 = arith.constant 668265263 : i32
    %11 = arith.muli %8, %c668265263_i32 : i32
    %c374761393_i32 = arith.constant 374761393 : i32
    %12 = arith.addi %11, %c374761393_i32 : i32
    %c-1640531535_i32 = arith.constant -1640531535 : i32
    %13 = vector.broadcast %c-1640531535_i32 : i32 to vector<2x512xi32>
    %14 = arith.muli %7, %13 : vector<2x512xi32>
    %15 = vector.broadcast %10 : i32 to vector<2x512xi32>
    %16 = arith.addi %14, %15 : vector<2x512xi32>
    %c16_i32 = arith.constant 16 : i32
    %17 = vector.broadcast %c16_i32 : i32 to vector<2x512xi32>
    %18 = arith.shrui %16, %17 : vector<2x512xi32>
    %19 = arith.xori %16, %18 : vector<2x512xi32>
    %c2146121005_i32 = arith.constant 2146121005 : i32
    %20 = vector.broadcast %c2146121005_i32 : i32 to vector<2x512xi32>
    %21 = arith.muli %19, %20 : vector<2x512xi32>
    %c15_i32 = arith.constant 15 : i32
    %22 = vector.broadcast %c15_i32 : i32 to vector<2x512xi32>
    %23 = arith.shrui %21, %22 : vector<2x512xi32>
    %24 = arith.xori %21, %23 : vector<2x512xi32>
    %c-2073254261_i32 = arith.constant -2073254261 : i32
    %25 = vector.broadcast %c-2073254261_i32 : i32 to vector<2x512xi32>
    %26 = arith.muli %24, %25 : vector<2x512xi32>
    %c16_i32_0 = arith.constant 16 : i32
    %27 = vector.broadcast %c16_i32_0 : i32 to vector<2x512xi32>
    %28 = arith.shrui %26, %27 : vector<2x512xi32>
    %29 = arith.xori %26, %28 : vector<2x512xi32>
    %c8_i32 = arith.constant 8 : i32
    %30 = vector.broadcast %c8_i32 : i32 to vector<2x512xi32>
    %31 = arith.shrui %29, %30 : vector<2x512xi32>
    %32 = arith.sitofp %31 : vector<2x512xi32> to vector<2x512xf32>
    %c-1640531535_i32_1 = arith.constant -1640531535 : i32
    %33 = vector.broadcast %c-1640531535_i32_1 : i32 to vector<2x512xi32>
    %34 = arith.muli %7, %33 : vector<2x512xi32>
    %35 = vector.broadcast %12 : i32 to vector<2x512xi32>
    %36 = arith.addi %34, %35 : vector<2x512xi32>
    %c16_i32_2 = arith.constant 16 : i32
    %37 = vector.broadcast %c16_i32_2 : i32 to vector<2x512xi32>
    %38 = arith.shrui %36, %37 : vector<2x512xi32>
    %39 = arith.xori %36, %38 : vector<2x512xi32>
    %c2146121005_i32_3 = arith.constant 2146121005 : i32
    %40 = vector.broadcast %c2146121005_i32_3 : i32 to vector<2x512xi32>
    %41 = arith.muli %39, %40 : vector<2x512xi32>
    %c15_i32_4 = arith.constant 15 : i32
    %42 = vector.broadcast %c15_i32_4 : i32 to vector<2x512xi32>
    %43 = arith.shrui %41, %42 : vector<2x512xi32>
    %44 = arith.xori %41, %43 : vector<2x512xi32>
    %c-2073254261_i32_5 = arith.constant -2073254261 : i32
    %45 = vector.broadcast %c-2073254261_i32_5 : i32 to vector<2x512xi32>
    %46 = arith.muli %44, %45 : vector<2x512xi32>
    %c16_i32_6 = arith.constant 16 : i32
    %47 = vector.broadcast %c16_i32_6 : i32 to vector<2x512xi32>
    %48 = arith.shrui %46, %47 : vector<2x512xi32>
    %49 = arith.xori %46, %48 : vector<2x512xi32>
    %c8_i32_7 = arith.constant 8 : i32
    %50 = vector.broadcast %c8_i32_7 : i32 to vector<2x512xi32>
    %51 = arith.shrui %49, %50 : vector<2x512xi32>
    %52 = arith.sitofp %51 : vector<2x512xi32> to vector<2x512xf32>
    %cst = arith.constant 5.96046448E-8 : f32
    %53 = vector.broadcast %cst : f32 to vector<2x512xf32>
    %54 = arith.mulf %32, %53 : vector<2x512xf32>
    %cst_8 = arith.constant 2.98023224E-8 : f32
    %55 = vector.broadcast %cst_8 : f32 to vector<2x512xf32>
    %56 = arith.addf %54, %55 : vector<2x512xf32>
    %cst_9 = arith.constant 5.96046448E-8 : f32
    %57 = vector.broadcast %cst_9 : f32 to vector<2x512xf32>
    %58 = arith.mulf %52, %57 : vector<2x512xf32>
    %59 = math.log %56 : vector<2x512xf32>
    %cst_10 = arith.constant -2.000000e+00 : f32
    %60 = vector.broadcast %cst_10 : f32 to vector<2x512xf32>
    %61 = arith.mulf %60, %59 : vector<2x512xf32>
    %62 = math.sqrt %61 : vector<2x512xf32>
    %cst_11 = arith.constant 1.000000e+00 : f32
    %63 = vector.broadcast %cst_11 : f32 to vector<2x512xf32>
    %64 = arith.mulf %62, %63 : vector<2x512xf32>
    %cst_12 = arith.constant 6.28318548 : f32
    %65 = vector.broadcast %cst_12 : f32 to vector<2x512xf32>
    %66 = arith.mulf %65, %58 : vector<2x512xf32>
    %c0_13 = arith.constant 0 : index
    %c0_14 = arith.constant 0 : index
    %67 = vector.load %arg2[%c0_13, %c0_14] : memref<2x1024xf32, #tpu.memory_space<vmem>>, vector<2x512xf32>
    %68 = math.cos %66 : vector<2x512xf32>
    %69 = arith.mulf %64, %68 : vector<2x512xf32>
    %70 = arith.addf %67, %69 : vector<2x512xf32>
    %cst_15 = arith.constant 0.000000e+00 : f32
    %71 = vector.broadcast %cst_15 : f32 to vector<2x512xf32>
    %72 = arith.addf %70, %71 : vector<2x512xf32>
    %c0_16 = arith.constant 0 : index
    %c0_17 = arith.constant 0 : index
    %73 = vector.load %arg3[%c0_16, %c0_17] : memref<2x1024xf32, #tpu.memory_space<vmem>>, vector<2x512xf32>
    tpu.vector_store %arg3[%c0_16, %c0_17], %72 {strides = array<i32>} : memref<2x1024xf32, #tpu.memory_space<vmem>>, vector<2x512xf32>,
    %c0_18 = arith.constant 0 : index
    %c512 = arith.constant 512 : index
    %74 = vector.load %arg2[%c0_18, %c512] : memref<2x1024xf32, #tpu.memory_space<vmem>>, vector<2x512xf32>
    %75 = math.sin %66 : vector<2x512xf32>
    %76 = arith.mulf %64, %75 : vector<2x512xf32>
    %77 = arith.addf %74, %76 : vector<2x512xf32>
    %cst_19 = arith.constant 0.000000e+00 : f32
    %78 = vector.broadcast %cst_19 : f32 to vector<2x512xf32>
    %79 = arith.addf %77, %78 : vector<2x512xf32>
    %c0_20 = arith.constant 0 : index
    %c512_21 = arith.constant 512 : index
    %80 = vector.load %arg3[%c0_20, %c512_21] : memref<2x1024xf32, #tpu.memory_space<vmem>>, vector<2x512xf32>
    tpu.vector_store %arg3[%c0_20, %c512_21], %79 {strides = array<i32>} : memref<2x1024xf32, #tpu.memory_space<vmem>>, vector<2x512xf32>,
    return
  }
  func.func @transform_0(%arg0: i32, %arg1: memref<1xi32, #tpu.memory_space<smem>>) -> (i32, i32) {
    %c0_i32 = arith.constant 0 : i32
    %c0_i32_0 = arith.constant 0 : i32
    return %arg0, %c0_i32 : i32, i32
  }
  func.func @transform_1(%arg0: i32, %arg1: memref<1xi32, #tpu.memory_space<smem>>) -> (i32, i32) {
    %c0_i32 = arith.constant 0 : i32
    %c0_i32_0 = arith.constant 0 : i32
    return %arg0, %c0_i32 : i32, i32
  }
}

</mosaic_0001>

<llo_original>
// kernel: tpu_custom_call.1
$region0: #{tpu_custom_call.1}
  #allocation0 [shape = 'u32[]', space=smem, size = 0x4, offset = 0x4, fixed_abs, tag = 'smem constant byte address 0x4 - core index']
  #allocation1 [shape = 'u32[144,128]{1,0:T(1,128)}', space=vmem, size = 0x12000, scoped, tag = 'internal scratch']
  #allocation2 [shape = 's32[1]{0}', space=sflag, size = 0x4, scoped, tag = 'scoped memory for tpu_custom_call.1']
  #allocation3 [shape = 's32[1]{0:T(128)S(6)}', space=smem, size = 0x200, scoped, tag = 'prefetched SMEM operand 0']
  %s0 = inlined_call_operand.<no memory space> [shape: s32[1], index: 0, kind: input, shape index: {}]
  %s1 = inlined_call_operand.hbm [shape: f32[2,1024], index: 1, kind: input, shape index: {}]
  %s2 = inlined_call_operand.hbm [shape: f32[2,1024], index: 2, kind: output, shape index: {}]
  %s3 = sld [smem:[#allocation0]]
  $region18: #{tpu_custom_call.1} parent=0
    _
  %s5 = ssub.s32 1, %s3
  %s6 = scalar_select 0, %s5, %s3
  %7 = sst [smem:[#allocation3]] %s0
  $region1: #{tpu_custom_call.1} parent=0
    #allocation4 [shape = 'u8[8192]{0}', space=vmem, size = 0x2000, scoped, tag = 'input window, operand 1, single buffered']
    #allocation5 [shape = 's32[1]{0}', space=sflag, size = 0x4, scoped, tag = 'scoped memory for tpu_custom_call.1']
    #allocation6 [shape = 's32[1]{0}', space=sflag, size = 0x4, scoped, tag = 'scoped memory for tpu_custom_call.1']
    #allocation7 [shape = 'u8[8192]{0}', space=vmem, size = 0x2000, scoped, tag = 'output window, operand 0, single buffered']
    %8 = vsyncpa [#allocation5], 0
    %9 = vsyncpa [#allocation6], 0
    // Predicated region
    $region2: #{tpu_custom_call.1} parent=1 // pred_check
      _
    $region3: #{tpu_custom_call.1} parent=1 // pred_check_branch
      %11 = sbr.rel (0) target = $region5
    $region4: #{tpu_custom_call.1} parent=1 // pred_region
      %s13 = ssub.s32 256, 256
      %14 = vsyncadd [#allocation5], %s13
      %s16 = sshll.u32 [#allocation4], 4
      %s17 = int_to_ptr.vmem [resolvable:$true] %s16
      %19 = dma.hbm_to_vmem [thread:$0]  %s1, 256, %s17, [#allocation5]
    $region5: #{tpu_custom_call.1} parent=1 // pred_fallthru
      _
    // Predicated region
    $region6: #{tpu_custom_call.1} parent=1 // pred_check
      _
    $region7: #{tpu_custom_call.1} parent=1 // pred_check_branch
      %21 = sbr.rel (0) target = $region9
    $region8: #{tpu_custom_call.1} parent=1 // pred_region
      %22 = dma.done [#allocation5], 256
    $region9: #{tpu_custom_call.1} parent=1 // pred_fallthru
      _
    %v23 = vlaneseq
    %v24 = vshrl.u32 %v23, 7
    %v25 = vlaneseq
    %v26 = vand.u32 %v25, 127
    %v27 = vadd.s32 %v26, 128
    %v28 = vadd.s32 %v26, 256
    %v29 = vadd.s32 %v26, 384
    %s30 = smul.u32 0, 1024
    %v31 = vmul.u32 %v24, 512
    %v32 = vstv %s30
    %v33 = vadd.s32 %v32, %v31
    %v34 = vadd.s32 %v33, %v26
    %v35 = vadd.s32 %v33, %v27
    %v36 = vadd.s32 %v33, %v28
    %v37 = vadd.s32 %v33, %v29
    %s38 = sld [smem:[#allocation3]]
    %s39 = smul.u32 %s38, 2246822519
    %s40 = sadd.s32 %s39, 3266489917
    %s41 = smul.u32 %s38, 668265263
    %s42 = sadd.s32 %s41, 374761393
    %v43 = vmul.u32 %v34, 2654435761
    %v44 = vmul.u32 %v35, 2654435761
    %v45 = vmul.u32 %v36, 2654435761
    %v46 = vmul.u32 %v37, 2654435761
    %v47 = vstv %s40
    %v48 = vadd.s32 %v43, %v47
    %v49 = vadd.s32 %v44, %v47
    %v50 = vadd.s32 %v45, %v47
    %v51 = vadd.s32 %v46, %v47
    %v52 = vshrl.u32 %v48, 16
    %v53 = vshrl.u32 %v49, 16
    %v54 = vshrl.u32 %v50, 16
    %v55 = vshrl.u32 %v51, 16
    %v56 = vxor.u32 %v48, %v52
    %v57 = vxor.u32 %v49, %v53
    %v58 = vxor.u32 %v50, %v54
    %v59 = vxor.u32 %v51, %v55
    %v60 = vmul.u32 %v56, 2146121005
    %v61 = vmul.u32 %v57, 2146121005
    %v62 = vmul.u32 %v58, 2146121005
    %v63 = vmul.u32 %v59, 2146121005
    %v64 = vshrl.u32 %v60, 15
    %v65 = vshrl.u32 %v61, 15
    %v66 = vshrl.u32 %v62, 15
    %v67 = vshrl.u32 %v63, 15
    %v68 = vxor.u32 %v60, %v64
    %v69 = vxor.u32 %v61, %v65
    %v70 = vxor.u32 %v62, %v66
    %v71 = vxor.u32 %v63, %v67
    %v72 = vmul.u32 %v68, 2221713035
    %v73 = vmul.u32 %v69, 2221713035
    %v74 = vmul.u32 %v70, 2221713035
    %v75 = vmul.u32 %v71, 2221713035
    %v76 = vshrl.u32 %v72, 16
    %v77 = vshrl.u32 %v73, 16
    %v78 = vshrl.u32 %v74, 16
    %v79 = vshrl.u32 %v75, 16
    %v80 = vxor.u32 %v72, %v76
    %v81 = vxor.u32 %v73, %v77
    %v82 = vxor.u32 %v74, %v78
    %v83 = vxor.u32 %v75, %v79
    %v84 = vshrl.u32 %v80, 8
    %v85 = vshrl.u32 %v81, 8
    %v86 = vshrl.u32 %v82, 8
    %v87 = vshrl.u32 %v83, 8
    %v88 = vcvt.s32.f32 %v84
    %v89 = vcvt.s32.f32 %v85
    %v90 = vcvt.s32.f32 %v86
    %v91 = vcvt.s32.f32 %v87
    %v92 = vstv %s42
    %v93 = vadd.s32 %v43, %v92
    %v94 = vadd.s32 %v44, %v92
    %v95 = vadd.s32 %v45, %v92
    %v96 = vadd.s32 %v46, %v92
    %v97 = vshrl.u32 %v93, 16
    %v98 = vshrl.u32 %v94, 16
    %v99 = vshrl.u32 %v95, 16
    %v100 = vshrl.u32 %v96, 16
    %v101 = vxor.u32 %v93, %v97
    %v102 = vxor.u32 %v94, %v98
    %v103 = vxor.u32 %v95, %v99
    %v104 = vxor.u32 %v96, %v100
    %v105 = vmul.u32 %v101, 2146121005
    %v106 = vmul.u32 %v102, 2146121005
    %v107 = vmul.u32 %v103, 2146121005
    %v108 = vmul.u32 %v104, 2146121005
    %v109 = vshrl.u32 %v105, 15
    %v110 = vshrl.u32 %v106, 15
    %v111 = vshrl.u32 %v107, 15
    %v112 = vshrl.u32 %v108, 15
    %v113 = vxor.u32 %v105, %v109
    %v114 = vxor.u32 %v106, %v110
    %v115 = vxor.u32 %v107, %v111
    %v116 = vxor.u32 %v108, %v112
    %v117 = vmul.u32 %v113, 2221713035
    %v118 = vmul.u32 %v114, 2221713035
    %v119 = vmul.u32 %v115, 2221713035
    %v120 = vmul.u32 %v116, 2221713035
    %v121 = vshrl.u32 %v117, 16
    %v122 = vshrl.u32 %v118, 16
    %v123 = vshrl.u32 %v119, 16
    %v124 = vshrl.u32 %v120, 16
    %v125 = vxor.u32 %v117, %v121
    %v126 = vxor.u32 %v118, %v122
    %v127 = vxor.u32 %v119, %v123
    %v128 = vxor.u32 %v120, %v124
    %v129 = vshrl.u32 %v125, 8
    %v130 = vshrl.u32 %v126, 8
    %v131 = vshrl.u32 %v127, 8
    %v132 = vshrl.u32 %v128, 8
    %v133 = vcvt.s32.f32 %v129
    %v134 = vcvt.s32.f32 %v130
    %v135 = vcvt.s32.f32 %v131
    %v136 = vcvt.s32.f32 %v132
    %v137 = vmul.f32 %v88, 5.9604645e-08
    %v138 = vmul.f32 %v89, 5.9604645e-08
    %v139 = vmul.f32 %v90, 5.9604645e-08
    %v140 = vmul.f32 %v91, 5.9604645e-08
    %v141 = vadd.f32 %v137, 2.9802322e-08
    %v142 = vadd.f32 %v138, 2.9802322e-08
    %v143 = vadd.f32 %v139, 2.9802322e-08
    %v144 = vadd.f32 %v140, 2.9802322e-08
    %v145 = vmul.f32 %v133, 5.9604645e-08
    %v146 = vmul.f32 %v134, 5.9604645e-08
    %v147 = vmul.f32 %v135, 5.9604645e-08
    %v148 = vmul.f32 %v136, 5.9604645e-08
    %v149 = vlog2.pop %v141
    %v150 = vmul.f32 %v149, 0.6931472
    %v151 = vlog2.pop %v142
    %v152 = vmul.f32 %v151, 0.6931472
    %v153 = vlog2.pop %v143
    %v154 = vmul.f32 %v153, 0.6931472
    %v155 = vlog2.pop %v144
    %v156 = vmul.f32 %v155, 0.6931472
    %v157 = vmul.f32 %v150, -2.0
    %v158 = vmul.f32 %v152, -2.0
    %v159 = vmul.f32 %v154, -2.0
    %v160 = vmul.f32 %v156, -2.0
    %v161 = vrsqrt.pop %v157
    %v162 = vmul.f32 %v157, %v161
    %vm163 = vcmp.eq.f32.partialorder %v157, inf
    %v164 = vsel %vm163, %v157, %v162
    %vm165 = vcmp.eq.f32.partialorder %v157, 0.0
    %v166 = vand.u32 %v157, 2147483648
    %v167 = vsel %vm165, %v166, %v164
    %v168 = vrsqrt.pop %v158
    %v169 = vmul.f32 %v158, %v168
    %vm170 = vcmp.eq.f32.partialorder %v158, inf
    %v171 = vsel %vm170, %v158, %v169
    %vm172 = vcmp.eq.f32.partialorder %v158, 0.0
    %v173 = vand.u32 %v158, 2147483648
    %v174 = vsel %vm172, %v173, %v171
    %v175 = vrsqrt.pop %v159
    %v176 = vmul.f32 %v159, %v175
    %vm177 = vcmp.eq.f32.partialorder %v159, inf
    %v178 = vsel %vm177, %v159, %v176
    %vm179 = vcmp.eq.f32.partialorder %v159, 0.0
    %v180 = vand.u32 %v159, 2147483648
    %v181 = vsel %vm179, %v180, %v178
    %v182 = vrsqrt.pop %v160
    %v183 = vmul.f32 %v160, %v182
    %vm184 = vcmp.eq.f32.partialorder %v160, inf
    %v185 = vsel %vm184, %v160, %v183
    %vm186 = vcmp.eq.f32.partialorder %v160, 0.0
    %v187 = vand.u32 %v160, 2147483648
    %v188 = vsel %vm186, %v187, %v185
    %v189 = vmul.f32 %v145, 6.2831855
    %v190 = vmul.f32 %v146, 6.2831855
    %v191 = vmul.f32 %v147, 6.2831855
    %v192 = vmul.f32 %v148, 6.2831855
    %v193 = vld [vmem:[#allocation4] sm:$0xff]
    %v194 = vand.u32 2147483647, %v189
    %vm195 = vcmp.le.f32.partialorder %v194, 0.7853982
    %vm196 = vcmp.lt.s32.totalorder %v189, 0
    %v197 = vand.u32 %v189, 2139095040
    %v198 = vshrl.u32 %v197, 23
    %v199 = vsub.s32 %v198, 127
    %v200 = vand.u32 2147483647, %v189
    %v201 = vand.u32 %v200, 8388607
    %v202 = vor.u32 %v201, 8388608
    %v203 = vsub.s32 0, %v202
    %v204 = vadd.s32 %v199, 1
    %vm205 = vcmp.gt.s32.totalorder %v204, 0
    %v206 = vsel %vm205, %v204, 0
    %v207 = vshrl.u32 %v206, 5
    %v208 = vand.u32 %v206, 31
    %v209 = vsub.s32 32, %v208
    %v210 = vshrl.u32 683565275, %v209
    %v211 = vshll.u32 683565275, %v208
    %v212 = vshrl.u32 2475754826, %v209
    %v213 = vor.u32 %v211, %v212
    %v214 = vshll.u32 2475754826, %v208
    %v215 = vshrl.u32 2131351028, %v209
    %v216 = vor.u32 %v214, %v215
    %v217 = vshll.u32 2131351028, %v208
    %v218 = vshrl.u32 2102212464, %v209
    %v219 = vor.u32 %v217, %v218
    %v220 = vshll.u32 2102212464, %v208
    %v221 = vshrl.u32 920167782, %v209
    %v222 = vor.u32 %v220, %v221
    %v223 = vshll.u32 920167782, %v208
    %v224 = vshrl.u32 1326507024, %v209
    %v225 = vor.u32 %v223, %v224
    %vm226 = vcmp.lt.s32.totalorder %v207, 1
    %vm227 = vcmp.lt.s32.totalorder %v207, 2
    %vm228 = vcmp.lt.s32.totalorder %v207, 3
    %vm229 = vcmp.lt.s32.totalorder %v207, 4
    %v230 = vsel %vm226, %v210, %v213
    %v231 = vsel %vm229, %v219, 2102212464
    %v232 = vsel %vm228, %v216, %v231
    %v233 = vsel %vm227, %v230, %v232
    %v234 = vsel %vm226, %v213, %v216
    %v235 = vsel %vm229, %v222, 920167782
    %v236 = vsel %vm228, %v219, %v235
    %v237 = vsel %vm227, %v234, %v236
    %v238 = vsel %vm226, %v216, %v219
    %v239 = vsel %vm229, %v225, 1326507024
    %v240 = vsel %vm228, %v222, %v239
    %v241 = vsel %vm227, %v238, %v240
    %v242 = vshll.u32 %v202, 8
    %v243 = vmul.u32.u64.compose %v242, %v241
    %v244 = vextract.low.u32 %v243
    %v245 = vextract.high.u32 %v243
    %v246 = vmul.u32.u64.compose %v242, %v237
    %v247 = vextract.low.u32 %v246
    %v248 = vextract.high.u32 %v246
    %v249 = vmul.u32 %v242, %v233
    %v250 = vadd.s32 %v245, %v247
    %vm251 = vc.u32 %v245, %v247
    %v252 = vadd.s32 %v248, 1
    %v253 = vsel %vm251, %v252, %v248
    %v254 = vadd.s32 %v249, %v253
    %v255 = vadd.s32 %v254, 536870912
    %v256 = vshrl.u32 %v255, 30
    %v257 = vshll.u32 %v256, 30
    %v258 = vsub.s32 %v254, %v257
    %vm259 = vcmp.lt.s32.totalorder %v258, 0
    %v260 = vsub.s32 0, %v258
    %v261 = vsel %vm259, %v260, %v258
    %v262 = vclz %v261
    %v263 = vsub.s32 %v262, 2
    %vm264 = vcmp.gt.s32.totalorder 0, %v263
    %v265 = vsel %vm264, 0, %v263
    %v266 = vsub.s32 32, %v265
    %v267 = vshll.u32 %v258, %v265
    %v268 = vshrl.u32 %v250, %v266
    %v269 = vor.u32 %v267, %v268
    %v270 = vsub.s32 4294967266, %v265
    %v271 = vadd.s32 %v270, 127
    %v272 = vshll.u32 %v271, 23
    %v273 = vor.u32 4788187, %v272
    %v274 = vand.u32 2147483647, %v273
    %v276 = vcvt.s32.f32 %v269
    %v277 = vmul.f32 %v276, %v274
    %v278 = vxor.u32 %v277, 2147483648
    %v279 = vsel %vm196, %v278, %v277
    %v280 = vsub.s32 4, %v256
    %v281 = vsel %vm196, %v280, %v256
    %v282 = vsel %vm195, %v189, %v279
    %v283 = vsel %vm195, 0, %v281
    %v284 = vcosq.f32.pop %v282
    %v285 = vsinq.f32.pop %v282
    %vm286 = vweird.f32 %v189
    %v287 = vand.u32 %v283, 3
    %vm288 = vcmp.lt.s32.totalorder %v287, 2
    %vm289 = vcmp.eq.s32.totalorder %v287, 0
    %v290 = vxor.u32 %v285, 2147483648
    %v291 = vsel %vm289, %v284, %v290
    %vm292 = vcmp.eq.s32.totalorder %v287, 2
    %v293 = vxor.u32 %v284, 2147483648
    %v294 = vsel %vm292, %v293, %v285
    %v295 = vsel %vm288, %v291, %v294
    %v296 = vsel %vm286, nan, %v295
    %v297 = vand.u32 2147483647, %v190
    %vm298 = vcmp.le.f32.partialorder %v297, 0.7853982
    %vm299 = vcmp.lt.s32.totalorder %v190, 0
    %v300 = vand.u32 %v190, 2139095040
    %v301 = vshrl.u32 %v300, 23
    %v302 = vsub.s32 %v301, 127
    %v303 = vand.u32 2147483647, %v190
    %v304 = vand.u32 %v303, 8388607
    %v305 = vor.u32 %v304, 8388608
    %v306 = vsub.s32 0, %v305
    %v307 = vadd.s32 %v302, 1
    %vm308 = vcmp.gt.s32.totalorder %v307, 0
    %v309 = vsel %vm308, %v307, 0
    %v310 = vshrl.u32 %v309, 5
    %v311 = vand.u32 %v309, 31
    %v312 = vsub.s32 32, %v311
    %v313 = vshrl.u32 683565275, %v312
    %v314 = vshll.u32 683565275, %v311
    %v315 = vshrl.u32 2475754826, %v312
    %v316 = vor.u32 %v314, %v315
    %v317 = vshll.u32 2475754826, %v311
    %v318 = vshrl.u32 2131351028, %v312
    %v319 = vor.u32 %v317, %v318
    %v320 = vshll.u32 2131351028, %v311
    %v321 = vshrl.u32 2102212464, %v312
    %v322 = vor.u32 %v320, %v321
    %v323 = vshll.u32 2102212464, %v311
    %v324 = vshrl.u32 920167782, %v312
    %v325 = vor.u32 %v323, %v324
    %v326 = vshll.u32 920167782, %v311
    %v327 = vshrl.u32 1326507024, %v312
    %v328 = vor.u32 %v326, %v327
    %vm329 = vcmp.lt.s32.totalorder %v310, 1
    %vm330 = vcmp.lt.s32.totalorder %v310, 2
    %vm331 = vcmp.lt.s32.totalorder %v310, 3
    %vm332 = vcmp.lt.s32.totalorder %v310, 4
    %v333 = vsel %vm329, %v313, %v316
    %v334 = vsel %vm332, %v322, 2102212464
    %v335 = vsel %vm331, %v319, %v334
    %v336 = vsel %vm330, %v333, %v335
    %v337 = vsel %vm329, %v316, %v319
    %v338 = vsel %vm332, %v325, 920167782
    %v339 = vsel %vm331, %v322, %v338
    %v340 = vsel %vm330, %v337, %v339
    %v341 = vsel %vm329, %v319, %v322
    %v342 = vsel %vm332, %v328, 1326507024
    %v343 = vsel %vm331, %v325, %v342
    %v344 = vsel %vm330, %v341, %v343
    %v345 = vshll.u32 %v305, 8
    %v346 = vmul.u32.u64.compose %v345, %v344
    %v347 = vextract.low.u32 %v346
    %v348 = vextract.high.u32 %v346
    %v349 = vmul.u32.u64.compose %v345, %v340
    %v350 = vextract.low.u32 %v349
    %v351 = vextract.high.u32 %v349
    %v352 = vmul.u32 %v345, %v336
    %v353 = vadd.s32 %v348, %v350
    %vm354 = vc.u32 %v348, %v350
    %v355 = vadd.s32 %v351, 1
    %v356 = vsel %vm354, %v355, %v351
    %v357 = vadd.s32 %v352, %v356
    %v358 = vadd.s32 %v357, 536870912
    %v359 = vshrl.u32 %v358, 30
    %v360 = vshll.u32 %v359, 30
    %v361 = vsub.s32 %v357, %v360
    %vm362 = vcmp.lt.s32.totalorder %v361, 0
    %v363 = vsub.s32 0, %v361
    %v364 = vsel %vm362, %v363, %v361
    %v365 = vclz %v364
    %v366 = vsub.s32 %v365, 2
    %vm367 = vcmp.gt.s32.totalorder 0, %v366
    %v368 = vsel %vm367, 0, %v366
    %v369 = vsub.s32 32, %v368
    %v370 = vshll.u32 %v361, %v368
    %v371 = vshrl.u32 %v353, %v369
    %v372 = vor.u32 %v370, %v371
    %v373 = vsub.s32 4294967266, %v368
    %v374 = vadd.s32 %v373, 127
    %v375 = vshll.u32 %v374, 23
    %v376 = vor.u32 4788187, %v375
    %v377 = vand.u32 2147483647, %v376
    %v379 = vcvt.s32.f32 %v372
    %v380 = vmul.f32 %v379, %v377
    %v381 = vxor.u32 %v380, 2147483648
    %v382 = vsel %vm299, %v381, %v380
    %v383 = vsub.s32 4, %v359
    %v384 = vsel %vm299, %v383, %v359
    %v385 = vsel %vm298, %v190, %v382
    %v386 = vsel %vm298, 0, %v384
    %v387 = vcosq.f32.pop %v385
    %v388 = vsinq.f32.pop %v385
    %vm389 = vweird.f32 %v190
    %v390 = vand.u32 %v386, 3
    %vm391 = vcmp.lt.s32.totalorder %v390, 2
    %vm392 = vcmp.eq.s32.totalorder %v390, 0
    %v393 = vxor.u32 %v388, 2147483648
    %v394 = vsel %vm392, %v387, %v393
    %vm395 = vcmp.eq.s32.totalorder %v390, 2
    %v396 = vxor.u32 %v387, 2147483648
    %v397 = vsel %vm395, %v396, %v388
    %v398 = vsel %vm391, %v394, %v397
    %v399 = vsel %vm389, nan, %v398
    %v400 = vand.u32 2147483647, %v191
    %vm401 = vcmp.le.f32.partialorder %v400, 0.7853982
    %vm402 = vcmp.lt.s32.totalorder %v191, 0
    %v403 = vand.u32 %v191, 2139095040
    %v404 = vshrl.u32 %v403, 23
    %v405 = vsub.s32 %v404, 127
    %v406 = vand.u32 2147483647, %v191
    %v407 = vand.u32 %v406, 8388607
    %v408 = vor.u32 %v407, 8388608
    %v409 = vsub.s32 0, %v408
    %v410 = vadd.s32 %v405, 1
    %vm411 = vcmp.gt.s32.totalorder %v410, 0
    %v412 = vsel %vm411, %v410, 0
    %v413 = vshrl.u32 %v412, 5
    %v414 = vand.u32 %v412, 31
    %v415 = vsub.s32 32, %v414
    %v416 = vshrl.u32 683565275, %v415
    %v417 = vshll.u32 683565275, %v414
    %v418 = vshrl.u32 2475754826, %v415
    %v419 = vor.u32 %v417, %v418
    %v420 = vshll.u32 2475754826, %v414
    %v421 = vshrl.u32 2131351028, %v415
    %v422 = vor.u32 %v420, %v421
    %v423 = vshll.u32 2131351028, %v414
    %v424 = vshrl.u32 2102212464, %v415
    %v425 = vor.u32 %v423, %v424
    %v426 = vshll.u32 2102212464, %v414
    %v427 = vshrl.u32 920167782, %v415
    %v428 = vor.u32 %v426, %v427
    %v429 = vshll.u32 920167782, %v414
    %v430 = vshrl.u32 1326507024, %v415
    %v431 = vor.u32 %v429, %v430
    %vm432 = vcmp.lt.s32.totalorder %v413, 1
    %vm433 = vcmp.lt.s32.totalorder %v413, 2
    %vm434 = vcmp.lt.s32.totalorder %v413, 3
    %vm435 = vcmp.lt.s32.totalorder %v413, 4
    %v436 = vsel %vm432, %v416, %v419
    %v437 = vsel %vm435, %v425, 2102212464
    %v438 = vsel %vm434, %v422, %v437
    %v439 = vsel %vm433, %v436, %v438
    %v440 = vsel %vm432, %v419, %v422
    %v441 = vsel %vm435, %v428, 920167782
    %v442 = vsel %vm434, %v425, %v441
    %v443 = vsel %vm433, %v440, %v442
    %v444 = vsel %vm432, %v422, %v425
    %v445 = vsel %vm435, %v431, 1326507024
    %v446 = vsel %vm434, %v428, %v445
    %v447 = vsel %vm433, %v444, %v446
    %v448 = vshll.u32 %v408, 8
    %v449 = vmul.u32.u64.compose %v448, %v447
    %v450 = vextract.low.u32 %v449
    %v451 = vextract.high.u32 %v449
    %v452 = vmul.u32.u64.compose %v448, %v443
    %v453 = vextract.low.u32 %v452
    %v454 = vextract.high.u32 %v452
    %v455 = vmul.u32 %v448, %v439
    %v456 = vadd.s32 %v451, %v453
    %vm457 = vc.u32 %v451, %v453
    %v458 = vadd.s32 %v454, 1
    %v459 = vsel %vm457, %v458, %v454
    %v460 = vadd.s32 %v455, %v459
    %v461 = vadd.s32 %v460, 536870912
    %v462 = vshrl.u32 %v461, 30
    %v463 = vshll.u32 %v462, 30
    %v464 = vsub.s32 %v460, %v463
    %vm465 = vcmp.lt.s32.totalorder %v464, 0
    %v466 = vsub.s32 0, %v464
    %v467 = vsel %vm465, %v466, %v464
    %v468 = vclz %v467
    %v469 = vsub.s32 %v468, 2
    %vm470 = vcmp.gt.s32.totalorder 0, %v469
    %v471 = vsel %vm470, 0, %v469
    %v472 = vsub.s32 32, %v471
    %v473 = vshll.u32 %v464, %v471
    %v474 = vshrl.u32 %v456, %v472
    %v475 = vor.u32 %v473, %v474
    %v476 = vsub.s32 4294967266, %v471
    %v477 = vadd.s32 %v476, 127
    %v478 = vshll.u32 %v477, 23
    %v479 = vor.u32 4788187, %v478
    %v480 = vand.u32 2147483647, %v479
    %v482 = vcvt.s32.f32 %v475
    %v483 = vmul.f32 %v482, %v480
    %v484 = vxor.u32 %v483, 2147483648
    %v485 = vsel %vm402, %v484, %v483
    %v486 = vsub.s32 4, %v462
    %v487 = vsel %vm402, %v486, %v462
    %v488 = vsel %vm401, %v191, %v485
    %v489 = vsel %vm401, 0, %v487
    %v490 = vcosq.f32.pop %v488
    %v491 = vsinq.f32.pop %v488
    %vm492 = vweird.f32 %v191
    %v493 = vand.u32 %v489, 3
    %vm494 = vcmp.lt.s32.totalorder %v493, 2
    %vm495 = vcmp.eq.s32.totalorder %v493, 0
    %v496 = vxor.u32 %v491, 2147483648
    %v497 = vsel %vm495, %v490, %v496
    %vm498 = vcmp.eq.s32.totalorder %v493, 2
    %v499 = vxor.u32 %v490, 2147483648
    %v500 = vsel %vm498, %v499, %v491
    %v501 = vsel %vm494, %v497, %v500
    %v502 = vsel %vm492, nan, %v501
    %v503 = vand.u32 2147483647, %v192
    %vm504 = vcmp.le.f32.partialorder %v503, 0.7853982
    %vm505 = vcmp.lt.s32.totalorder %v192, 0
    %v506 = vand.u32 %v192, 2139095040
    %v507 = vshrl.u32 %v506, 23
    %v508 = vsub.s32 %v507, 127
    %v509 = vand.u32 2147483647, %v192
    %v510 = vand.u32 %v509, 8388607
    %v511 = vor.u32 %v510, 8388608
    %v512 = vsub.s32 0, %v511
    %v513 = vadd.s32 %v508, 1
    %vm514 = vcmp.gt.s32.totalorder %v513, 0
    %v515 = vsel %vm514, %v513, 0
    %v516 = vshrl.u32 %v515, 5
    %v517 = vand.u32 %v515, 31
    %v518 = vsub.s32 32, %v517
    %v519 = vshrl.u32 683565275, %v518
    %v520 = vshll.u32 683565275, %v517
    %v521 = vshrl.u32 2475754826, %v518
    %v522 = vor.u32 %v520, %v521
    %v523 = vshll.u32 2475754826, %v517
    %v524 = vshrl.u32 2131351028, %v518
    %v525 = vor.u32 %v523, %v524
    %v526 = vshll.u32 2131351028, %v517
    %v527 = vshrl.u32 2102212464, %v518
    %v528 = vor.u32 %v526, %v527
    %v529 = vshll.u32 2102212464, %v517
    %v530 = vshrl.u32 920167782, %v518
    %v531 = vor.u32 %v529, %v530
    %v532 = vshll.u32 920167782, %v517
    %v533 = vshrl.u32 1326507024, %v518
    %v534 = vor.u32 %v532, %v533
    %vm535 = vcmp.lt.s32.totalorder %v516, 1
    %vm536 = vcmp.lt.s32.totalorder %v516, 2
    %vm537 = vcmp.lt.s32.totalorder %v516, 3
    %vm538 = vcmp.lt.s32.totalorder %v516, 4
    %v539 = vsel %vm535, %v519, %v522
    %v540 = vsel %vm538, %v528, 2102212464
    %v541 = vsel %vm537, %v525, %v540
    %v542 = vsel %vm536, %v539, %v541
    %v543 = vsel %vm535, %v522, %v525
    %v544 = vsel %vm538, %v531, 920167782
    %v545 = vsel %vm537, %v528, %v544
    %v546 = vsel %vm536, %v543, %v545
    %v547 = vsel %vm535, %v525, %v528
    %v548 = vsel %vm538, %v534, 1326507024
    %v549 = vsel %vm537, %v531, %v548
    %v550 = vsel %vm536, %v547, %v549
    %v551 = vshll.u32 %v511, 8
    %v552 = vmul.u32.u64.compose %v551, %v550
    %v553 = vextract.low.u32 %v552
    %v554 = vextract.high.u32 %v552
    %v555 = vmul.u32.u64.compose %v551, %v546
    %v556 = vextract.low.u32 %v555
    %v557 = vextract.high.u32 %v555
    %v558 = vmul.u32 %v551, %v542
    %v559 = vadd.s32 %v554, %v556
    %vm560 = vc.u32 %v554, %v556
    %v561 = vadd.s32 %v557, 1
    %v562 = vsel %vm560, %v561, %v557
    %v563 = vadd.s32 %v558, %v562
    %v564 = vadd.s32 %v563, 536870912
    %v565 = vshrl.u32 %v564, 30
    %v566 = vshll.u32 %v565, 30
    %v567 = vsub.s32 %v563, %v566
    %vm568 = vcmp.lt.s32.totalorder %v567, 0
    %v569 = vsub.s32 0, %v567
    %v570 = vsel %vm568, %v569, %v567
    %v571 = vclz %v570
    %v572 = vsub.s32 %v571, 2
    %vm573 = vcmp.gt.s32.totalorder 0, %v572
    %v574 = vsel %vm573, 0, %v572
    %v575 = vsub.s32 32, %v574
    %v576 = vshll.u32 %v567, %v574
    %v577 = vshrl.u32 %v559, %v575
    %v578 = vor.u32 %v576, %v577
    %v579 = vsub.s32 4294967266, %v574
    %v580 = vadd.s32 %v579, 127
    %v581 = vshll.u32 %v580, 23
    %v582 = vor.u32 4788187, %v581
    %v583 = vand.u32 2147483647, %v582
    %v585 = vcvt.s32.f32 %v578
    %v586 = vmul.f32 %v585, %v583
    %v587 = vxor.u32 %v586, 2147483648
    %v588 = vsel %vm505, %v587, %v586
    %v589 = vsub.s32 4, %v565
    %v590 = vsel %vm505, %v589, %v565
    %v591 = vsel %vm504, %v192, %v588
    %v592 = vsel %vm504, 0, %v590
    %v593 = vcosq.f32.pop %v591
    %v594 = vsinq.f32.pop %v591
    %vm595 = vweird.f32 %v192
    %v596 = vand.u32 %v592, 3
    %vm597 = vcmp.lt.s32.totalorder %v596, 2
    %vm598 = vcmp.eq.s32.totalorder %v596, 0
    %v599 = vxor.u32 %v594, 2147483648
    %v600 = vsel %vm598, %v593, %v599
    %vm601 = vcmp.eq.s32.totalorder %v596, 2
    %v602 = vxor.u32 %v593, 2147483648
    %v603 = vsel %vm601, %v602, %v594
    %v604 = vsel %vm597, %v600, %v603
    %v605 = vsel %vm595, nan, %v604
    %v606 = vmul.f32 %v167, %v296
    %v607 = vmul.f32 %v174, %v399
    %v608 = vmul.f32 %v181, %v502
    %v609 = vmul.f32 %v188, %v605
    %v614 = vcombine.low %v606, %v607
    %v615 = vcombine.low %v608, %v609
    %v617 = vunpack.c.l.s4 1983009808
    %v618 = vunpack.c.0.s8 %v617
    %v619 = vlaneseq
    %v620 = vshrl.u32 %v619, 7
    %v621 = vsub.s32 %v618, %v620
    %v622 = vrot.slane %v614, %v621
    %v624 = vunpack.c.l.s4 1983009808
    %v625 = vunpack.c.0.s8 %v624
    %v626 = vlaneseq
    %v627 = vshrl.u32 %v626, 7
    %v628 = vsub.s32 %v625, %v627
    %v629 = vrot.slane %v615, %v628
    %v630 = vcombine.low %v622, %v629
    %v632 = vadd.f32 %v193, %v630
    %v633 = vadd.f32 %v632, 0.0
    %634 = vst [vmem:[#allocation7] sm:$0xff] %v633
    %v635 = vld [vmem:[#allocation4 + $0x8] sm:$0xff]
    %v636 = vand.u32 2147483647, %v189
    %vm637 = vcmp.le.f32.partialorder %v636, 0.7853982
    %vm638 = vcmp.lt.s32.totalorder %v189, 0
    %v639 = vand.u32 %v189, 2139095040
    %v640 = vshrl.u32 %v639, 23
    %v641 = vsub.s32 %v640, 127
    %v642 = vand.u32 2147483647, %v189
    %v643 = vand.u32 %v642, 8388607
    %v644 = vor.u32 %v643, 8388608
    %v645 = vsub.s32 0, %v644
    %v646 = vadd.s32 %v641, 1
    %vm647 = vcmp.gt.s32.totalorder %v646, 0
    %v648 = vsel %vm647, %v646, 0
    %v649 = vshrl.u32 %v648, 5
    %v650 = vand.u32 %v648, 31
    %v651 = vsub.s32 32, %v650
    %v652 = vshrl.u32 683565275, %v651
    %v653 = vshll.u32 683565275, %v650
    %v654 = vshrl.u32 2475754826, %v651
    %v655 = vor.u32 %v653, %v654
    %v656 = vshll.u32 2475754826, %v650
    %v657 = vshrl.u32 2131351028, %v651
    %v658 = vor.u32 %v656, %v657
    %v659 = vshll.u32 2131351028, %v650
    %v660 = vshrl.u32 2102212464, %v651
    %v661 = vor.u32 %v659, %v660
    %v662 = vshll.u32 2102212464, %v650
    %v663 = vshrl.u32 920167782, %v651
    %v664 = vor.u32 %v662, %v663
    %v665 = vshll.u32 920167782, %v650
    %v666 = vshrl.u32 1326507024, %v651
    %v667 = vor.u32 %v665, %v666
    %vm668 = vcmp.lt.s32.totalorder %v649, 1
    %vm669 = vcmp.lt.s32.totalorder %v649, 2
    %vm670 = vcmp.lt.s32.totalorder %v649, 3
    %vm671 = vcmp.lt.s32.totalorder %v649, 4
    %v672 = vsel %vm668, %v652, %v655
    %v673 = vsel %vm671, %v661, 2102212464
    %v674 = vsel %vm670, %v658, %v673
    %v675 = vsel %vm669, %v672, %v674
    %v676 = vsel %vm668, %v655, %v658
    %v677 = vsel %vm671, %v664, 920167782
    %v678 = vsel %vm670, %v661, %v677
    %v679 = vsel %vm669, %v676, %v678
    %v680 = vsel %vm668, %v658, %v661
    %v681 = vsel %vm671, %v667, 1326507024
    %v682 = vsel %vm670, %v664, %v681
    %v683 = vsel %vm669, %v680, %v682
    %v684 = vshll.u32 %v644, 8
    %v685 = vmul.u32.u64.compose %v684, %v683
    %v686 = vextract.low.u32 %v685
    %v687 = vextract.high.u32 %v685
    %v688 = vmul.u32.u64.compose %v684, %v679
    %v689 = vextract.low.u32 %v688
    %v690 = vextract.high.u32 %v688
    %v691 = vmul.u32 %v684, %v675
    %v692 = vadd.s32 %v687, %v689
    %vm693 = vc.u32 %v687, %v689
    %v694 = vadd.s32 %v690, 1
    %v695 = vsel %vm693, %v694, %v690
    %v696 = vadd.s32 %v691, %v695
    %v697 = vadd.s32 %v696, 536870912
    %v698 = vshrl.u32 %v697, 30
    %v699 = vshll.u32 %v698, 30
    %v700 = vsub.s32 %v696, %v699
    %vm701 = vcmp.lt.s32.totalorder %v700, 0
    %v702 = vsub.s32 0, %v700
    %v703 = vsel %vm701, %v702, %v700
    %v704 = vclz %v703
    %v705 = vsub.s32 %v704, 2
    %vm706 = vcmp.gt.s32.totalorder 0, %v705
    %v707 = vsel %vm706, 0, %v705
    %v708 = vsub.s32 32, %v707
    %v709 = vshll.u32 %v700, %v707
    %v710 = vshrl.u32 %v692, %v708
    %v711 = vor.u32 %v709, %v710
    %v712 = vsub.s32 4294967266, %v707
    %v713 = vadd.s32 %v712, 127
    %v714 = vshll.u32 %v713, 23
    %v715 = vor.u32 4788187, %v714
    %v716 = vand.u32 2147483647, %v715
    %v718 = vcvt.s32.f32 %v711
    %v719 = vmul.f32 %v718, %v716
    %v720 = vxor.u32 %v719, 2147483648
    %v721 = vsel %vm638, %v720, %v719
    %v722 = vsub.s32 4, %v698
    %v723 = vsel %vm638, %v722, %v698
    %v724 = vsel %vm637, %v189, %v721
    %v725 = vsel %vm637, 0, %v723
    %v726 = vcosq.f32.pop %v724
    %v727 = vsinq.f32.pop %v724
    %vm728 = vweird.f32 %v189
    %v729 = vadd.s32 %v725, 3
    %v730 = vand.u32 %v729, 3
    %vm731 = vcmp.lt.s32.totalorder %v730, 2
    %vm732 = vcmp.eq.s32.totalorder %v730, 0
    %v733 = vxor.u32 %v727, 2147483648
    %v734 = vsel %vm732, %v726, %v733
    %vm735 = vcmp.eq.s32.totalorder %v730, 2
    %v736 = vxor.u32 %v726, 2147483648
    %v737 = vsel %vm735, %v736, %v727
    %v738 = vsel %vm731, %v734, %v737
    %v739 = vsel %vm728, nan, %v738
    %v740 = vand.u32 2147483647, %v190
    %vm741 = vcmp.le.f32.partialorder %v740, 0.7853982
    %vm742 = vcmp.lt.s32.totalorder %v190, 0
    %v743 = vand.u32 %v190, 2139095040
    %v744 = vshrl.u32 %v743, 23
    %v745 = vsub.s32 %v744, 127
    %v746 = vand.u32 2147483647, %v190
    %v747 = vand.u32 %v746, 8388607
    %v748 = vor.u32 %v747, 8388608
    %v749 = vsub.s32 0, %v748
    %v750 = vadd.s32 %v745, 1
    %vm751 = vcmp.gt.s32.totalorder %v750, 0
    %v752 = vsel %vm751, %v750, 0
    %v753 = vshrl.u32 %v752, 5
    %v754 = vand.u32 %v752, 31
    %v755 = vsub.s32 32, %v754
    %v756 = vshrl.u32 683565275, %v755
    %v757 = vshll.u32 683565275, %v754
    %v758 = vshrl.u32 2475754826, %v755
    %v759 = vor.u32 %v757, %v758
    %v760 = vshll.u32 2475754826, %v754
    %v761 = vshrl.u32 2131351028, %v755
    %v762 = vor.u32 %v760, %v761
    %v763 = vshll.u32 2131351028, %v754
    %v764 = vshrl.u32 2102212464, %v755
    %v765 = vor.u32 %v763, %v764
    %v766 = vshll.u32 2102212464, %v754
    %v767 = vshrl.u32 920167782, %v755
    %v768 = vor.u32 %v766, %v767
    %v769 = vshll.u32 920167782, %v754
    %v770 = vshrl.u32 1326507024, %v755
    %v771 = vor.u32 %v769, %v770
    %vm772 = vcmp.lt.s32.totalorder %v753, 1
    %vm773 = vcmp.lt.s32.totalorder %v753, 2
    %vm774 = vcmp.lt.s32.totalorder %v753, 3
    %vm775 = vcmp.lt.s32.totalorder %v753, 4
    %v776 = vsel %vm772, %v756, %v759
    %v777 = vsel %vm775, %v765, 2102212464
    %v778 = vsel %vm774, %v762, %v777
    %v779 = vsel %vm773, %v776, %v778
    %v780 = vsel %vm772, %v759, %v762
    %v781 = vsel %vm775, %v768, 920167782
    %v782 = vsel %vm774, %v765, %v781
    %v783 = vsel %vm773, %v780, %v782
    %v784 = vsel %vm772, %v762, %v765
    %v785 = vsel %vm775, %v771, 1326507024
    %v786 = vsel %vm774, %v768, %v785
    %v787 = vsel %vm773, %v784, %v786
    %v788 = vshll.u32 %v748, 8
    %v789 = vmul.u32.u64.compose %v788, %v787
    %v790 = vextract.low.u32 %v789
    %v791 = vextract.high.u32 %v789
    %v792 = vmul.u32.u64.compose %v788, %v783
    %v793 = vextract.low.u32 %v792
    %v794 = vextract.high.u32 %v792
    %v795 = vmul.u32 %v788, %v779
    %v796 = vadd.s32 %v791, %v793
    %vm797 = vc.u32 %v791, %v793
    %v798 = vadd.s32 %v794, 1
    %v799 = vsel %vm797, %v798, %v794
    %v800 = vadd.s32 %v795, %v799
    %v801 = vadd.s32 %v800, 536870912
    %v802 = vshrl.u32 %v801, 30
    %v803 = vshll.u32 %v802, 30
    %v804 = vsub.s32 %v800, %v803
    %vm805 = vcmp.lt.s32.totalorder %v804, 0
    %v806 = vsub.s32 0, %v804
    %v807 = vsel %vm805, %v806, %v804
    %v808 = vclz %v807
    %v809 = vsub.s32 %v808, 2
    %vm810 = vcmp.gt.s32.totalorder 0, %v809
    %v811 = vsel %vm810, 0, %v809
    %v812 = vsub.s32 32, %v811
    %v813 = vshll.u32 %v804, %v811
    %v814 = vshrl.u32 %v796, %v812
    %v815 = vor.u32 %v813, %v814
    %v816 = vsub.s32 4294967266, %v811
    %v817 = vadd.s32 %v816, 127
    %v818 = vshll.u32 %v817, 23
    %v819 = vor.u32 4788187, %v818
    %v820 = vand.u32 2147483647, %v819
    %v822 = vcvt.s32.f32 %v815
    %v823 = vmul.f32 %v822, %v820
    %v824 = vxor.u32 %v823, 2147483648
    %v825 = vsel %vm742, %v824, %v823
    %v826 = vsub.s32 4, %v802
    %v827 = vsel %vm742, %v826, %v802
    %v828 = vsel %vm741, %v190, %v825
    %v829 = vsel %vm741, 0, %v827
    %v830 = vcosq.f32.pop %v828
    %v831 = vsinq.f32.pop %v828
    %vm832 = vweird.f32 %v190
    %v833 = vadd.s32 %v829, 3
    %v834 = vand.u32 %v833, 3
    %vm835 = vcmp.lt.s32.totalorder %v834, 2
    %vm836 = vcmp.eq.s32.totalorder %v834, 0
    %v837 = vxor.u32 %v831, 2147483648
    %v838 = vsel %vm836, %v830, %v837
    %vm839 = vcmp.eq.s32.totalorder %v834, 2
    %v840 = vxor.u32 %v830, 2147483648
    %v841 = vsel %vm839, %v840, %v831
    %v842 = vsel %vm835, %v838, %v841
    %v843 = vsel %vm832, nan, %v842
    %v844 = vand.u32 2147483647, %v191
    %vm845 = vcmp.le.f32.partialorder %v844, 0.7853982
    %vm846 = vcmp.lt.s32.totalorder %v191, 0
    %v847 = vand.u32 %v191, 2139095040
    %v848 = vshrl.u32 %v847, 23
    %v849 = vsub.s32 %v848, 127
    %v850 = vand.u32 2147483647, %v191
    %v851 = vand.u32 %v850, 8388607
    %v852 = vor.u32 %v851, 8388608
    %v853 = vsub.s32 0, %v852
    %v854 = vadd.s32 %v849, 1
    %vm855 = vcmp.gt.s32.totalorder %v854, 0
    %v856 = vsel %vm855, %v854, 0
    %v857 = vshrl.u32 %v856, 5
    %v858 = vand.u32 %v856, 31
    %v859 = vsub.s32 32, %v858
    %v860 = vshrl.u32 683565275, %v859
    %v861 = vshll.u32 683565275, %v858
    %v862 = vshrl.u32 2475754826, %v859
    %v863 = vor.u32 %v861, %v862
    %v864 = vshll.u32 2475754826, %v858
    %v865 = vshrl.u32 2131351028, %v859
    %v866 = vor.u32 %v864, %v865
    %v867 = vshll.u32 2131351028, %v858
    %v868 = vshrl.u32 2102212464, %v859
    %v869 = vor.u32 %v867, %v868
    %v870 = vshll.u32 2102212464, %v858
    %v871 = vshrl.u32 920167782, %v859
    %v872 = vor.u32 %v870, %v871
    %v873 = vshll.u32 920167782, %v858
    %v874 = vshrl.u32 1326507024, %v859
    %v875 = vor.u32 %v873, %v874
    %vm876 = vcmp.lt.s32.totalorder %v857, 1
    %vm877 = vcmp.lt.s32.totalorder %v857, 2
    %vm878 = vcmp.lt.s32.totalorder %v857, 3
    %vm879 = vcmp.lt.s32.totalorder %v857, 4
    %v880 = vsel %vm876, %v860, %v863
    %v881 = vsel %vm879, %v869, 2102212464
    %v882 = vsel %vm878, %v866, %v881
    %v883 = vsel %vm877, %v880, %v882
    %v884 = vsel %vm876, %v863, %v866
    %v885 = vsel %vm879, %v872, 920167782
    %v886 = vsel %vm878, %v869, %v885
    %v887 = vsel %vm877, %v884, %v886
    %v888 = vsel %vm876, %v866, %v869
    %v889 = vsel %vm879, %v875, 1326507024
    %v890 = vsel %vm878, %v872, %v889
    %v891 = vsel %vm877, %v888, %v890
    %v892 = vshll.u32 %v852, 8
    %v893 = vmul.u32.u64.compose %v892, %v891
    %v894 = vextract.low.u32 %v893
    %v895 = vextract.high.u32 %v893
    %v896 = vmul.u32.u64.compose %v892, %v887
    %v897 = vextract.low.u32 %v896
    %v898 = vextract.high.u32 %v896
    %v899 = vmul.u32 %v892, %v883
    %v900 = vadd.s32 %v895, %v897
    %vm901 = vc.u32 %v895, %v897
    %v902 = vadd.s32 %v898, 1
    %v903 = vsel %vm901, %v902, %v898
    %v904 = vadd.s32 %v899, %v903
    %v905 = vadd.s32 %v904, 536870912
    %v906 = vshrl.u32 %v905, 30
    %v907 = vshll.u32 %v906, 30
    %v908 = vsub.s32 %v904, %v907
    %vm909 = vcmp.lt.s32.totalorder %v908, 0
    %v910 = vsub.s32 0, %v908
    %v911 = vsel %vm909, %v910, %v908
    %v912 = vclz %v911
    %v913 = vsub.s32 %v912, 2
    %vm914 = vcmp.gt.s32.totalorder 0, %v913
    %v915 = vsel %vm914, 0, %v913
    %v916 = vsub.s32 32, %v915
    %v917 = vshll.u32 %v908, %v915
    %v918 = vshrl.u32 %v900, %v916
    %v919 = vor.u32 %v917, %v918
    %v920 = vsub.s32 4294967266, %v915
    %v921 = vadd.s32 %v920, 127
    %v922 = vshll.u32 %v921, 23
    %v923 = vor.u32 4788187, %v922
    %v924 = vand.u32 2147483647, %v923
    %v926 = vcvt.s32.f32 %v919
    %v927 = vmul.f32 %v926, %v924
    %v928 = vxor.u32 %v927, 2147483648
    %v929 = vsel %vm846, %v928, %v927
    %v930 = vsub.s32 4, %v906
    %v931 = vsel %vm846, %v930, %v906
    %v932 = vsel %vm845, %v191, %v929
    %v933 = vsel %vm845, 0, %v931
    %v934 = vcosq.f32.pop %v932
    %v935 = vsinq.f32.pop %v932
    %vm936 = vweird.f32 %v191
    %v937 = vadd.s32 %v933, 3
    %v938 = vand.u32 %v937, 3
    %vm939 = vcmp.lt.s32.totalorder %v938, 2
    %vm940 = vcmp.eq.s32.totalorder %v938, 0
    %v941 = vxor.u32 %v935, 2147483648
    %v942 = vsel %vm940, %v934, %v941
    %vm943 = vcmp.eq.s32.totalorder %v938, 2
    %v944 = vxor.u32 %v934, 2147483648
    %v945 = vsel %vm943, %v944, %v935
    %v946 = vsel %vm939, %v942, %v945
    %v947 = vsel %vm936, nan, %v946
    %v948 = vand.u32 2147483647, %v192
    %vm949 = vcmp.le.f32.partialorder %v948, 0.7853982
    %vm950 = vcmp.lt.s32.totalorder %v192, 0
    %v951 = vand.u32 %v192, 2139095040
    %v952 = vshrl.u32 %v951, 23
    %v953 = vsub.s32 %v952, 127
    %v954 = vand.u32 2147483647, %v192
    %v955 = vand.u32 %v954, 8388607
    %v956 = vor.u32 %v955, 8388608
    %v957 = vsub.s32 0, %v956
    %v958 = vadd.s32 %v953, 1
    %vm959 = vcmp.gt.s32.totalorder %v958, 0
    %v960 = vsel %vm959, %v958, 0
    %v961 = vshrl.u32 %v960, 5
    %v962 = vand.u32 %v960, 31
    %v963 = vsub.s32 32, %v962
    %v964 = vshrl.u32 683565275, %v963
    %v965 = vshll.u32 683565275, %v962
    %v966 = vshrl.u32 2475754826, %v963
    %v967 = vor.u32 %v965, %v966
    %v968 = vshll.u32 2475754826, %v962
    %v969 = vshrl.u32 2131351028, %v963
    %v970 = vor.u32 %v968, %v969
    %v971 = vshll.u32 2131351028, %v962
    %v972 = vshrl.u32 2102212464, %v963
    %v973 = vor.u32 %v971, %v972
    %v974 = vshll.u32 2102212464, %v962
    %v975 = vshrl.u32 920167782, %v963
    %v976 = vor.u32 %v974, %v975
    %v977 = vshll.u32 920167782, %v962
    %v978 = vshrl.u32 1326507024, %v963
    %v979 = vor.u32 %v977, %v978
    %vm980 = vcmp.lt.s32.totalorder %v961, 1
    %vm981 = vcmp.lt.s32.totalorder %v961, 2
    %vm982 = vcmp.lt.s32.totalorder %v961, 3
    %vm983 = vcmp.lt.s32.totalorder %v961, 4
    %v984 = vsel %vm980, %v964, %v967
    %v985 = vsel %vm983, %v973, 2102212464
    %v986 = vsel %vm982, %v970, %v985
    %v987 = vsel %vm981, %v984, %v986
    %v988 = vsel %vm980, %v967, %v970
    %v989 = vsel %vm983, %v976, 920167782
    %v990 = vsel %vm982, %v973, %v989
    %v991 = vsel %vm981, %v988, %v990
    %v992 = vsel %vm980, %v970, %v973
    %v993 = vsel %vm983, %v979, 1326507024
    %v994 = vsel %vm982, %v976, %v993
    %v995 = vsel %vm981, %v992, %v994
    %v996 = vshll.u32 %v956, 8
    %v997 = vmul.u32.u64.compose %v996, %v995
    %v998 = vextract.low.u32 %v997
    %v999 = vextract.high.u32 %v997
    %v1000 = vmul.u32.u64.compose %v996, %v991
    %v1001 = vextract.low.u32 %v1000
    %v1002 = vextract.high.u32 %v1000
    %v1003 = vmul.u32 %v996, %v987
    %v1004 = vadd.s32 %v999, %v1001
    %vm1005 = vc.u32 %v999, %v1001
    %v1006 = vadd.s32 %v1002, 1
    %v1007 = vsel %vm1005, %v1006, %v1002
    %v1008 = vadd.s32 %v1003, %v1007
    %v1009 = vadd.s32 %v1008, 536870912
    %v1010 = vshrl.u32 %v1009, 30
    %v1011 = vshll.u32 %v1010, 30
    %v1012 = vsub.s32 %v1008, %v1011
    %vm1013 = vcmp.lt.s32.totalorder %v1012, 0
    %v1014 = vsub.s32 0, %v1012
    %v1015 = vsel %vm1013, %v1014, %v1012
    %v1016 = vclz %v1015
    %v1017 = vsub.s32 %v1016, 2
    %vm1018 = vcmp.gt.s32.totalorder 0, %v1017
    %v1019 = vsel %vm1018, 0, %v1017
    %v1020 = vsub.s32 32, %v1019
    %v1021 = vshll.u32 %v1012, %v1019
    %v1022 = vshrl.u32 %v1004, %v1020
    %v1023 = vor.u32 %v1021, %v1022
    %v1024 = vsub.s32 4294967266, %v1019
    %v1025 = vadd.s32 %v1024, 127
    %v1026 = vshll.u32 %v1025, 23
    %v1027 = vor.u32 4788187, %v1026
    %v1028 = vand.u32 2147483647, %v1027
    %v1030 = vcvt.s32.f32 %v1023
    %v1031 = vmul.f32 %v1030, %v1028
    %v1032 = vxor.u32 %v1031, 2147483648
    %v1033 = vsel %vm950, %v1032, %v1031
    %v1034 = vsub.s32 4, %v1010
    %v1035 = vsel %vm950, %v1034, %v1010
    %v1036 = vsel %vm949, %v192, %v1033
    %v1037 = vsel %vm949, 0, %v1035
    %v1038 = vcosq.f32.pop %v1036
    %v1039 = vsinq.f32.pop %v1036
    %vm1040 = vweird.f32 %v192
    %v1041 = vadd.s32 %v1037, 3
    %v1042 = vand.u32 %v1041, 3
    %vm1043 = vcmp.lt.s32.totalorder %v1042, 2
    %vm1044 = vcmp.eq.s32.totalorder %v1042, 0
    %v1045 = vxor.u32 %v1039, 2147483648
    %v1046 = vsel %vm1044, %v1038, %v1045
    %vm1047 = vcmp.eq.s32.totalorder %v1042, 2
    %v1048 = vxor.u32 %v1038, 2147483648
    %v1049 = vsel %vm1047, %v1048, %v1039
    %v1050 = vsel %vm1043, %v1046, %v1049
    %v1051 = vsel %vm1040, nan, %v1050
    %v1052 = vmul.f32 %v167, %v739
    %v1053 = vmul.f32 %v174, %v843
    %v1054 = vmul.f32 %v181, %v947
    %v1055 = vmul.f32 %v188, %v1051
    %v1060 = vcombine.low %v1052, %v1053
    %v1061 = vcombine.low %v1054, %v1055
    %v1063 = vunpack.c.l.s4 1983009808
    %v1064 = vunpack.c.0.s8 %v1063
    %v1065 = vlaneseq
    %v1066 = vshrl.u32 %v1065, 7
    %v1067 = vsub.s32 %v1064, %v1066
    %v1068 = vrot.slane %v1060, %v1067
    %v1070 = vunpack.c.l.s4 1983009808
    %v1071 = vunpack.c.0.s8 %v1070
    %v1072 = vlaneseq
    %v1073 = vshrl.u32 %v1072, 7
    %v1074 = vsub.s32 %v1071, %v1073
    %v1075 = vrot.slane %v1061, %v1074
    %v1076 = vcombine.low %v1068, %v1075
    %v1078 = vadd.f32 %v635, %v1076
    %v1079 = vadd.f32 %v1078, 0.0
    %1080 = vst [vmem:[#allocation7 + $0x8] sm:$0xff] %v1079
    // Predicated region
    $region10: #{tpu_custom_call.1} parent=1 // pred_check
      _
    $region11: #{tpu_custom_call.1} parent=1 // pred_check_branch
      %1082 = sbr.rel (0) target = $region13
    $region12: #{tpu_custom_call.1} parent=1 // pred_region
      %s1084 = ssub.s32 256, 256
      %1085 = vsyncadd [#allocation6], %s1084
      %s1087 = sshll.u32 [#allocation7], 4
      %s1088 = int_to_ptr.vmem [resolvable:$true] %s1087
      %1090 = dma.vmem_to_hbm [thread:$0]  %s1088, 256, %s2, [#allocation6]
    $region13: #{tpu_custom_call.1} parent=1 // pred_fallthru
      _
    // Predicated region
    $region14: #{tpu_custom_call.1} parent=1 // pred_check
      _
    $region15: #{tpu_custom_call.1} parent=1 // pred_check_branch
      %1092 = sbr.rel (0) target = $region17
    $region16: #{tpu_custom_call.1} parent=1 // pred_region
      %1093 = dma.done [#allocation6], 256
    $region17: #{tpu_custom_call.1} parent=1 // pred_fallthru
      _
    %1094 = vsyncpa [#allocation5], 1
    %1095 = vsyncpa [#allocation6], 1

</llo_original>
